<compile_context>
chip_gen: v7x
topology: tpu7x:2x2x1
jax: 0.10.0
libtpu: 0.0.40
codegen_flags: <defaults>
</compile_context>

<pallas_src>
import jax
import jax.numpy as jnp
from jax import lax
from jax.experimental import pallas as pl
from jax.experimental.pallas import tpu as pltpu


def _round_up(x, m):
    return ((x + m - 1) // m) * m


def attention_kernel(row_ref, col_ref, pt_ref, qe_ref, kev_ref, w_ref, lam_ref,
                     o_ref, acc_ref):
    f32 = jnp.float32
    te = row_ref.shape[0]
    n_nodes, h = o_ref.shape
    de = qe_ref.shape[1] - h                       # eigs dim
    n_path = w_ref.shape[0]
    step = pl.program_id(0)

    @pl.when(step == 0)
    def _init():
        acc_ref[...] = jnp.zeros_like(acc_ref)

    row = row_ref[...]                             # [TE, 1] int32 (pad = -1)
    col = col_ref[...]                             # [TE, 1] int32
    ptv = pt_ref[...]                              # [TE, 1] int32

    # One-hot gather/scatter matrices for this edge tile (VPU iota compare).
    node_iota = lax.broadcasted_iota(jnp.int32, (te, n_nodes), 1)
    r_oh = (row == node_iota).astype(f32)          # [TE, N]
    c_oh = (col == node_iota).astype(f32)          # [TE, N]

    # Fused gathers (2 MXU passes): [q|eigs][row] and [k|eigs|v|1][col].
    g_r = jnp.dot(r_oh, qe_ref[...], preferred_element_type=f32)   # [TE, H+De]
    g_c = jnp.dot(c_oh, kev_ref[...], preferred_element_type=f32)  # [TE, H+De+H+1]

    # s0 = <q[row], k[col]> / sqrt(H) + exp(lambda0) * <eigs[row], eigs[col]>
    inv_sqrt = 1.0 / (h ** 0.5)
    lane = lax.broadcasted_iota(jnp.int32, (1, h + de), 1)
    elam = jnp.exp(jnp.full((1, h + de), lam_ref[0], dtype=f32))
    scale = jnp.where(lane < h, inv_sqrt, elam)                      # [1, H+De]
    s0 = jnp.sum(g_r * g_c[:, :h + de] * scale, axis=-1, keepdims=True)

    # s1 = path_emb(path_type): unrolled select against SMEM weights.
    s1 = jnp.zeros((te, 1), f32)
    for p in range(n_path):
        s1 = s1 + jnp.where(ptv == p, w_ref[p], 0.0)

    # clamp(exp(.), -5, 5)  (min is a no-op after exp; kept for torch parity).
    val0 = jnp.clip(jnp.exp(s0), -5.0, 5.0)        # [TE, 1]
    val1 = jnp.clip(jnp.exp(s1), -5.0, 5.0)        # [TE, 1]

    # Single fused scatter (1 MXU pass):
    #   acc[n, :] += sum_{row(e)=n} [v[col]*val0, val0, v[col]*val1, val1]
    ve1 = g_c[:, h + de:]                          # [TE, H+1]  = [v[col], 1]
    payload = jnp.concatenate([ve1 * val0, ve1 * val1], axis=-1)     # [TE, 2H+2]
    acc_ref[...] += lax.dot_general(r_oh, payload, (((0,), (0,)), ((), ())),
                                    preferred_element_type=f32)

    # Finalize: per-node softmax normalization + mean over the two branches.
    @pl.when(step == pl.num_programs(0) - 1)
    def _finalize():
        acc = acc_ref[...]
        o0 = acc[:, :h]
        d0 = acc[:, h:h + 1]
        o1 = acc[:, h + 1:2 * h + 1]
        d1 = acc[:, 2 * h + 1:2 * h + 2]
        d0 = jnp.where(d0 == 0.0, 1.0, d0)
        d1 = jnp.where(d1 == 0.0, 1.0, d1)
        o_ref[...] = 0.5 * (o0 / d0 + o1 / d1)


def attention_forward(q, k, v, eigs, indices_list, path_type_list,
                      path_emb_weight, lambda0, *, edge_tile=256):
    """SIGformer sparse attention forward ('eig+path'), edge-tiled Pallas kernel."""
    assert edge_tile % 8 == 0, "edge tile must be a multiple of 8 (sublanes)"
    idx = jnp.concatenate(indices_list, axis=-1)                 # [2, E]
    pt = jnp.concatenate(path_type_list, axis=-1)                # [E]
    row = idx[0].astype(jnp.int32)
    col = idx[1].astype(jnp.int32)
    ptc = pt.astype(jnp.int32)

    n, h = q.shape
    de = eigs.shape[1]
    e = row.shape[0]
    e_pad = _round_up(max(e, 1), edge_tile)
    num_tiles = e_pad // edge_tile

    # Padded edges: row = -1 (one-hot row is all zeros -> scatters nothing),
    # col / path_type = 0 (gather is harmless).
    row_p = jnp.pad(row, (0, e_pad - e), constant_values=-1).reshape(e_pad, 1)
    col_p = jnp.pad(col, (0, e_pad - e), constant_values=0).reshape(e_pad, 1)
    pt_p = jnp.pad(ptc, (0, e_pad - e), constant_values=0).reshape(e_pad, 1)

    f32 = jnp.float32
    # Fused feature tables: gather side [q|eigs], and [k|eigs|v|1] (the extra
    # ones column yields the softmax-denominator contribution for free).
    q_eigs = jnp.concatenate([q.astype(f32), eigs.astype(f32)], axis=1)
    kev = jnp.concatenate([k.astype(f32), eigs.astype(f32), v.astype(f32),
                           jnp.ones((n, 1), f32)], axis=1)
    w = path_emb_weight.astype(f32).reshape(-1)                  # [NPATH]
    lam = jnp.asarray(lambda0, f32).reshape(-1)                  # [1]

    smem = pl.BlockSpec(memory_space=pltpu.MemorySpace.SMEM)
    grid_spec = pltpu.PrefetchScalarGridSpec(
        num_scalar_prefetch=0,
        grid=(num_tiles,),
        in_specs=[
            pl.BlockSpec((edge_tile, 1), lambda i: (i, 0)),       # row
            pl.BlockSpec((edge_tile, 1), lambda i: (i, 0)),       # col
            pl.BlockSpec((edge_tile, 1), lambda i: (i, 0)),       # path type
            pl.BlockSpec((n, h + de), lambda i: (0, 0)),          # [q|eigs]
            pl.BlockSpec((n, h + de + h + 1), lambda i: (0, 0)),  # [k|eigs|v|1]
            smem,                                                 # path emb W
            smem,                                                 # lambda0
        ],
        out_specs=pl.BlockSpec((n, h), lambda i: (0, 0)),
        scratch_shapes=[pltpu.VMEM((n, 2 * h + 2), jnp.float32)],
    )
    return pl.pallas_call(
        attention_kernel,
        out_shape=jax.ShapeDtypeStruct((n, h), jnp.float32),
        grid_spec=grid_spec,
        compiler_params=pltpu.CompilerParams(
            dimension_semantics=("arbitrary",)),
    )(row_p, col_p, pt_p, q_eigs, kev, w, lam)


def attention_reference(q, k, v, eigs, indices_list, path_type_list,
                        path_emb_weight, lambda0):
    """Pure-JAX reference reproducing the torch forward."""
    idx = jnp.concatenate(indices_list, axis=-1)
    pt = jnp.concatenate(path_type_list, axis=-1)
    row, col = idx[0], idx[1]
    n, h = q.shape
    x = jnp.sum(q[row] * k[col], axis=-1) / jnp.sqrt(jnp.float32(h))
    y = jnp.sum(eigs[row] * eigs[col], axis=-1)
    z = path_emb_weight[pt, 0]
    s0 = x + jnp.exp(lambda0[0]) * y
    s1 = z

    def ssm(val):
        val = jnp.clip(jnp.exp(val), -5.0, 5.0)
        denom = jnp.zeros((n,), jnp.float32).at[row].add(val)
        denom = jnp.where(denom == 0.0, 1.0, denom)
        return val / denom[row]

    s = (ssm(s0) + ssm(s1)) * 0.5
    return jnp.zeros((n, h), jnp.float32).at[row].add(s[:, None] * v[col])


if __name__ == "__main__":
    N = 16          # number of nodes
    H = 32          # hidden_dim
    DE = 32         # eigs_dim
    SAMPLE_HOP = 3
    NPATH = 2 ** (SAMPLE_HOP + 1) - 2   # 14
    E_PER_HOP = 8

    key = jax.random.PRNGKey(0)
    kq, kk, kv, ke, kl, kw, *kidx = jax.random.split(key, 6 + 2 * SAMPLE_HOP)

    q = jax.random.normal(kq, (N, H), jnp.float32)
    k = jax.random.normal(kk, (N, H), jnp.float32)
    v = jax.random.normal(kv, (N, H), jnp.float32)
    eigs = jax.random.normal(ke, (N, DE), jnp.float32) * 0.2

    lambda0 = jax.random.normal(kl, (1,), jnp.float32) * 0.1
    path_emb_weight = jax.random.normal(kw, (NPATH, 1), jnp.float32) * 0.1

    indices_list, path_type_list = [], []
    for hop in range(SAMPLE_HOP):
        indices_list.append(
            jax.random.randint(kidx[2 * hop], (2, E_PER_HOP), 0, N, jnp.int32))
        path_type_list.append(
            jax.random.randint(kidx[2 * hop + 1], (E_PER_HOP,), 0, NPATH,
                               jnp.int32))

    # Small edge tile so the test exercises multi-step accumulation + padding
    # (24 real edges -> 2 tiles of 16, 8 padded edges).
    out = attention_forward(q, k, v, eigs, indices_list, path_type_list,
                            path_emb_weight, lambda0, edge_tile=16)
    out = jax.block_until_ready(out)

    ref = attention_reference(q, k, v, eigs, indices_list, path_type_list,
                              path_emb_weight, lambda0)
    assert out.shape == (N, H) and out.dtype == jnp.float32
    assert jnp.allclose(out, ref, rtol=1e-4, atol=1e-4), "kernel != reference"
    print("KERNEL_OK")
</pallas_src>

<mosaic_0001>
module attributes {stable_mosaic.version = 11 : i64} {
  func.func @attention_kernel(%arg0: i32, %arg1: memref<16x1xi32, #tpu.memory_space<vmem>>, %arg2: memref<16x1xi32, #tpu.memory_space<vmem>>, %arg3: memref<16x1xi32, #tpu.memory_space<vmem>>, %arg4: memref<16x64xf32, #tpu.memory_space<vmem>>, %arg5: memref<16x97xf32, #tpu.memory_space<vmem>>, %arg6: memref<14xf32, #tpu.memory_space<smem>>, %arg7: memref<1xf32, #tpu.memory_space<smem>>, %arg8: memref<16x32xf32, #tpu.memory_space<vmem>>, %arg9: memref<16x66xf32, #tpu.memory_space<vmem>>) attributes {dimension_semantics = [#tpu.dimension_semantics<arbitrary>], iteration_bounds = array<i64: 2>, scalar_prefetch = 0 : i64, scratch_operands = 1 : i64, tpu.core_type = #tpu.core_type<tc>, window_params = [{transform_indices = @transform_0, window_bounds = array<i64: 16, 1>}, {transform_indices = @transform_1, window_bounds = array<i64: 16, 1>}, {transform_indices = @transform_2, window_bounds = array<i64: 16, 1>}, {pipeline_mode = #tpu.pipeline_mode<synchronous>, transform_indices = @transform_3, window_bounds = array<i64: 16, 64>}, {pipeline_mode = #tpu.pipeline_mode<synchronous>, transform_indices = @transform_4, window_bounds = array<i64: 16, 97>}, {transform_indices = @transform_5, window_bounds = array<i64: 14>}, {transform_indices = @transform_6, window_bounds = array<i64: 1>}, {pipeline_mode = #tpu.pipeline_mode<synchronous>, transform_indices = @transform_7, window_bounds = array<i64: 16, 32>}]} {
    %c0_i32 = arith.constant 0 : i32
    %0 = arith.cmpi eq, %arg0, %c0_i32 : i32
    %1 = arith.extui %0 : i1 to i32
    %c0_i32_0 = arith.constant 0 : i32
    %2 = arith.cmpi ne, %1, %c0_i32_0 : i32
    scf.if %2 {
      %cst_42 = arith.constant 0.000000e+00 : f32
      %155 = vector.broadcast %cst_42 : f32 to vector<16x66xf32>
      %c0_43 = arith.constant 0 : index
      %c0_44 = arith.constant 0 : index
      %156 = vector.load %arg9[%c0_43, %c0_44] : memref<16x66xf32, #tpu.memory_space<vmem>>, vector<16x66xf32>
      tpu.vector_store %arg9[%c0_43, %c0_44], %155 {strides = array<i32>} : memref<16x66xf32, #tpu.memory_space<vmem>>, vector<16x66xf32>,
    } else {
    }
    %c0 = arith.constant 0 : index
    %c0_1 = arith.constant 0 : index
    %3 = vector.load %arg1[%c0, %c0_1] : memref<16x1xi32, #tpu.memory_space<vmem>>, vector<16x1xi32>
    %c0_2 = arith.constant 0 : index
    %c0_3 = arith.constant 0 : index
    %4 = vector.load %arg2[%c0_2, %c0_3] : memref<16x1xi32, #tpu.memory_space<vmem>>, vector<16x1xi32>
    %c0_4 = arith.constant 0 : index
    %c0_5 = arith.constant 0 : index
    %5 = vector.load %arg3[%c0_4, %c0_5] : memref<16x1xi32, #tpu.memory_space<vmem>>, vector<16x1xi32>
    %6 = tpu.iota {dimensions = array<i32: 1>} : vector<16x16xi32>
    %7 = vector.broadcast %3 : vector<16x1xi32> to vector<16x16xi32>
    %8 = arith.cmpi eq, %7, %6 : vector<16x16xi32>
    %9 = arith.extui %8 : vector<16x16xi1> to vector<16x16xi32>
    %10 = arith.sitofp %9 : vector<16x16xi32> to vector<16x16xf32>
    %11 = vector.broadcast %4 : vector<16x1xi32> to vector<16x16xi32>
    %12 = arith.cmpi eq, %11, %6 : vector<16x16xi32>
    %13 = arith.extui %12 : vector<16x16xi1> to vector<16x16xi32>
    %14 = arith.sitofp %13 : vector<16x16xi32> to vector<16x16xf32>
    %c0_6 = arith.constant 0 : index
    %c0_7 = arith.constant 0 : index
    %15 = vector.load %arg4[%c0_6, %c0_7] : memref<16x64xf32, #tpu.memory_space<vmem>>, vector<16x64xf32>
    %cst = arith.constant dense<0.000000e+00> : vector<16x64xf32>
    %16 = tpu.matmul %10, %15, %cst {dimension_numbers = #tpu.dot_dimension_numbers<[1], [0], [0], [1], [0, 0, 1, 1], [], []>} : vector<16x16xf32>, vector<16x64xf32>, vector<16x64xf32> -> vector<16x64xf32>
    %c0_8 = arith.constant 0 : index
    %c0_9 = arith.constant 0 : index
    %17 = vector.load %arg5[%c0_8, %c0_9] : memref<16x97xf32, #tpu.memory_space<vmem>>, vector<16x97xf32>
    %cst_10 = arith.constant dense<0.000000e+00> : vector<16x97xf32>
    %18 = tpu.matmul %14, %17, %cst_10 {dimension_numbers = #tpu.dot_dimension_numbers<[1], [0], [0], [1], [0, 0, 1, 1], [], []>} : vector<16x16xf32>, vector<16x97xf32>, vector<16x97xf32> -> vector<16x97xf32>
    %19 = tpu.iota {dimensions = array<i32: 1>} : vector<1x64xi32>
    %c0_11 = arith.constant 0 : index
    %20 = memref.load %arg7[%c0_11] : memref<1xf32, #tpu.memory_space<smem>>
    %21 = vector.broadcast %20 : f32 to vector<1x64xf32>
    %22 = math.exp %21 : vector<1x64xf32>
    %c32_i32 = arith.constant 32 : i32
    %23 = vector.broadcast %c32_i32 : i32 to vector<1x64xi32>
    %24 = arith.cmpi slt, %19, %23 : vector<1x64xi32>
    %cst_12 = arith.constant 0.176776692 : f32
    %25 = vector.broadcast %cst_12 : f32 to vector<1x64xf32>
    %26 = arith.select %24, %25, %22 : vector<1x64xi1>, vector<1x64xf32>
    %27 = vector.extract_strided_slice %18 {offsets = [0, 0], sizes = [16, 64], strides = [1, 1]} : vector<16x97xf32> to vector<16x64xf32>
    %28 = arith.mulf %16, %27 : vector<16x64xf32>
    %29 = vector.broadcast %26 : vector<1x64xf32> to vector<16x64xf32>
    %30 = arith.mulf %28, %29 : vector<16x64xf32>
    %cst_13 = arith.constant dense<0.000000e+00> : vector<16xf32>
    %31 = vector.multi_reduction <add>, %30, %cst_13 [1] : vector<16x64xf32> to vector<16xf32>
    %32 = vector.shape_cast %31 : vector<16xf32> to vector<16x1xf32>
    %cst_14 = arith.constant 0.000000e+00 : f32
    %33 = vector.broadcast %cst_14 : f32 to vector<16x1xf32>
    %c0_i32_15 = arith.constant 0 : i32
    %34 = vector.broadcast %c0_i32_15 : i32 to vector<16x1xi32>
    %35 = arith.cmpi eq, %5, %34 : vector<16x1xi32>
    %c0_16 = arith.constant 0 : index
    %36 = memref.load %arg6[%c0_16] : memref<14xf32, #tpu.memory_space<smem>>
    %cst_17 = arith.constant 0.000000e+00 : f32
    %37 = vector.broadcast %36 : f32 to vector<16x1xf32>
    %38 = vector.broadcast %cst_17 : f32 to vector<16x1xf32>
    %39 = arith.select %35, %37, %38 : vector<16x1xi1>, vector<16x1xf32>
    %40 = arith.addf %33, %39 : vector<16x1xf32>
    %c1_i32 = arith.constant 1 : i32
    %41 = vector.broadcast %c1_i32 : i32 to vector<16x1xi32>
    %42 = arith.cmpi eq, %5, %41 : vector<16x1xi32>
    %c1 = arith.constant 1 : index
    %43 = memref.load %arg6[%c1] : memref<14xf32, #tpu.memory_space<smem>>
    %cst_18 = arith.constant 0.000000e+00 : f32
    %44 = vector.broadcast %43 : f32 to vector<16x1xf32>
    %45 = vector.broadcast %cst_18 : f32 to vector<16x1xf32>
    %46 = arith.select %42, %44, %45 : vector<16x1xi1>, vector<16x1xf32>
    %47 = arith.addf %40, %46 : vector<16x1xf32>
    %c2_i32 = arith.constant 2 : i32
    %48 = vector.broadcast %c2_i32 : i32 to vector<16x1xi32>
    %49 = arith.cmpi eq, %5, %48 : vector<16x1xi32>
    %c2 = arith.constant 2 : index
    %50 = memref.load %arg6[%c2] : memref<14xf32, #tpu.memory_space<smem>>
    %cst_19 = arith.constant 0.000000e+00 : f32
    %51 = vector.broadcast %50 : f32 to vector<16x1xf32>
    %52 = vector.broadcast %cst_19 : f32 to vector<16x1xf32>
    %53 = arith.select %49, %51, %52 : vector<16x1xi1>, vector<16x1xf32>
    %54 = arith.addf %47, %53 : vector<16x1xf32>
    %c3_i32 = arith.constant 3 : i32
    %55 = vector.broadcast %c3_i32 : i32 to vector<16x1xi32>
    %56 = arith.cmpi eq, %5, %55 : vector<16x1xi32>
    %c3 = arith.constant 3 : index
    %57 = memref.load %arg6[%c3] : memref<14xf32, #tpu.memory_space<smem>>
    %cst_20 = arith.constant 0.000000e+00 : f32
    %58 = vector.broadcast %57 : f32 to vector<16x1xf32>
    %59 = vector.broadcast %cst_20 : f32 to vector<16x1xf32>
    %60 = arith.select %56, %58, %59 : vector<16x1xi1>, vector<16x1xf32>
    %61 = arith.addf %54, %60 : vector<16x1xf32>
    %c4_i32 = arith.constant 4 : i32
    %62 = vector.broadcast %c4_i32 : i32 to vector<16x1xi32>
    %63 = arith.cmpi eq, %5, %62 : vector<16x1xi32>
    %c4 = arith.constant 4 : index
    %64 = memref.load %arg6[%c4] : memref<14xf32, #tpu.memory_space<smem>>
    %cst_21 = arith.constant 0.000000e+00 : f32
    %65 = vector.broadcast %64 : f32 to vector<16x1xf32>
    %66 = vector.broadcast %cst_21 : f32 to vector<16x1xf32>
    %67 = arith.select %63, %65, %66 : vector<16x1xi1>, vector<16x1xf32>
    %68 = arith.addf %61, %67 : vector<16x1xf32>
    %c5_i32 = arith.constant 5 : i32
    %69 = vector.broadcast %c5_i32 : i32 to vector<16x1xi32>
    %70 = arith.cmpi eq, %5, %69 : vector<16x1xi32>
    %c5 = arith.constant 5 : index
    %71 = memref.load %arg6[%c5] : memref<14xf32, #tpu.memory_space<smem>>
    %cst_22 = arith.constant 0.000000e+00 : f32
    %72 = vector.broadcast %71 : f32 to vector<16x1xf32>
    %73 = vector.broadcast %cst_22 : f32 to vector<16x1xf32>
    %74 = arith.select %70, %72, %73 : vector<16x1xi1>, vector<16x1xf32>
    %75 = arith.addf %68, %74 : vector<16x1xf32>
    %c6_i32 = arith.constant 6 : i32
    %76 = vector.broadcast %c6_i32 : i32 to vector<16x1xi32>
    %77 = arith.cmpi eq, %5, %76 : vector<16x1xi32>
    %c6 = arith.constant 6 : index
    %78 = memref.load %arg6[%c6] : memref<14xf32, #tpu.memory_space<smem>>
    %cst_23 = arith.constant 0.000000e+00 : f32
    %79 = vector.broadcast %78 : f32 to vector<16x1xf32>
    %80 = vector.broadcast %cst_23 : f32 to vector<16x1xf32>
    %81 = arith.select %77, %79, %80 : vector<16x1xi1>, vector<16x1xf32>
    %82 = arith.addf %75, %81 : vector<16x1xf32>
    %c7_i32 = arith.constant 7 : i32
    %83 = vector.broadcast %c7_i32 : i32 to vector<16x1xi32>
    %84 = arith.cmpi eq, %5, %83 : vector<16x1xi32>
    %c7 = arith.constant 7 : index
    %85 = memref.load %arg6[%c7] : memref<14xf32, #tpu.memory_space<smem>>
    %cst_24 = arith.constant 0.000000e+00 : f32
    %86 = vector.broadcast %85 : f32 to vector<16x1xf32>
    %87 = vector.broadcast %cst_24 : f32 to vector<16x1xf32>
    %88 = arith.select %84, %86, %87 : vector<16x1xi1>, vector<16x1xf32>
    %89 = arith.addf %82, %88 : vector<16x1xf32>
    %c8_i32 = arith.constant 8 : i32
    %90 = vector.broadcast %c8_i32 : i32 to vector<16x1xi32>
    %91 = arith.cmpi eq, %5, %90 : vector<16x1xi32>
    %c8 = arith.constant 8 : index
    %92 = memref.load %arg6[%c8] : memref<14xf32, #tpu.memory_space<smem>>
    %cst_25 = arith.constant 0.000000e+00 : f32
    %93 = vector.broadcast %92 : f32 to vector<16x1xf32>
    %94 = vector.broadcast %cst_25 : f32 to vector<16x1xf32>
    %95 = arith.select %91, %93, %94 : vector<16x1xi1>, vector<16x1xf32>
    %96 = arith.addf %89, %95 : vector<16x1xf32>
    %c9_i32 = arith.constant 9 : i32
    %97 = vector.broadcast %c9_i32 : i32 to vector<16x1xi32>
    %98 = arith.cmpi eq, %5, %97 : vector<16x1xi32>
    %c9 = arith.constant 9 : index
    %99 = memref.load %arg6[%c9] : memref<14xf32, #tpu.memory_space<smem>>
    %cst_26 = arith.constant 0.000000e+00 : f32
    %100 = vector.broadcast %99 : f32 to vector<16x1xf32>
    %101 = vector.broadcast %cst_26 : f32 to vector<16x1xf32>
    %102 = arith.select %98, %100, %101 : vector<16x1xi1>, vector<16x1xf32>
    %103 = arith.addf %96, %102 : vector<16x1xf32>
    %c10_i32 = arith.constant 10 : i32
    %104 = vector.broadcast %c10_i32 : i32 to vector<16x1xi32>
    %105 = arith.cmpi eq, %5, %104 : vector<16x1xi32>
    %c10 = arith.constant 10 : index
    %106 = memref.load %arg6[%c10] : memref<14xf32, #tpu.memory_space<smem>>
    %cst_27 = arith.constant 0.000000e+00 : f32
    %107 = vector.broadcast %106 : f32 to vector<16x1xf32>
    %108 = vector.broadcast %cst_27 : f32 to vector<16x1xf32>
    %109 = arith.select %105, %107, %108 : vector<16x1xi1>, vector<16x1xf32>
    %110 = arith.addf %103, %109 : vector<16x1xf32>
    %c11_i32 = arith.constant 11 : i32
    %111 = vector.broadcast %c11_i32 : i32 to vector<16x1xi32>
    %112 = arith.cmpi eq, %5, %111 : vector<16x1xi32>
    %c11 = arith.constant 11 : index
    %113 = memref.load %arg6[%c11] : memref<14xf32, #tpu.memory_space<smem>>
    %cst_28 = arith.constant 0.000000e+00 : f32
    %114 = vector.broadcast %113 : f32 to vector<16x1xf32>
    %115 = vector.broadcast %cst_28 : f32 to vector<16x1xf32>
    %116 = arith.select %112, %114, %115 : vector<16x1xi1>, vector<16x1xf32>
    %117 = arith.addf %110, %116 : vector<16x1xf32>
    %c12_i32 = arith.constant 12 : i32
    %118 = vector.broadcast %c12_i32 : i32 to vector<16x1xi32>
    %119 = arith.cmpi eq, %5, %118 : vector<16x1xi32>
    %c12 = arith.constant 12 : index
    %120 = memref.load %arg6[%c12] : memref<14xf32, #tpu.memory_space<smem>>
    %cst_29 = arith.constant 0.000000e+00 : f32
    %121 = vector.broadcast %120 : f32 to vector<16x1xf32>
    %122 = vector.broadcast %cst_29 : f32 to vector<16x1xf32>
    %123 = arith.select %119, %121, %122 : vector<16x1xi1>, vector<16x1xf32>
    %124 = arith.addf %117, %123 : vector<16x1xf32>
    %c13_i32 = arith.constant 13 : i32
    %125 = vector.broadcast %c13_i32 : i32 to vector<16x1xi32>
    %126 = arith.cmpi eq, %5, %125 : vector<16x1xi32>
    %c13 = arith.constant 13 : index
    %127 = memref.load %arg6[%c13] : memref<14xf32, #tpu.memory_space<smem>>
    %cst_30 = arith.constant 0.000000e+00 : f32
    %128 = vector.broadcast %127 : f32 to vector<16x1xf32>
    %129 = vector.broadcast %cst_30 : f32 to vector<16x1xf32>
    %130 = arith.select %126, %128, %129 : vector<16x1xi1>, vector<16x1xf32>
    %131 = arith.addf %124, %130 : vector<16x1xf32>
    %132 = math.exp %32 : vector<16x1xf32>
    %cst_31 = arith.constant -5.000000e+00 : f32
    %cst_32 = arith.constant 5.000000e+00 : f32
    %133 = vector.broadcast %cst_31 : f32 to vector<16x1xf32>
    %134 = arith.maximumf %133, %132 : vector<16x1xf32>
    %135 = vector.broadcast %cst_32 : f32 to vector<16x1xf32>
    %136 = arith.minimumf %135, %134 : vector<16x1xf32>
    %137 = math.exp %131 : vector<16x1xf32>
    %cst_33 = arith.constant -5.000000e+00 : f32
    %cst_34 = arith.constant 5.000000e+00 : f32
    %138 = vector.broadcast %cst_33 : f32 to vector<16x1xf32>
    %139 = arith.maximumf %138, %137 : vector<16x1xf32>
    %140 = vector.broadcast %cst_34 : f32 to vector<16x1xf32>
    %141 = arith.minimumf %140, %139 : vector<16x1xf32>
    %142 = vector.extract_strided_slice %18 {offsets = [0, 64], sizes = [16, 33], strides = [1, 1]} : vector<16x97xf32> to vector<16x33xf32>
    %143 = vector.broadcast %136 : vector<16x1xf32> to vector<16x33xf32>
    %144 = arith.mulf %142, %143 : vector<16x33xf32>
    %145 = vector.broadcast %141 : vector<16x1xf32> to vector<16x33xf32>
    %146 = arith.mulf %142, %145 : vector<16x33xf32>
    %147 = tpu.concatenate %144, %146 in 1 : vector<16x33xf32>, vector<16x33xf32> -> vector<16x66xf32>
    %c0_35 = arith.constant 0 : index
    %c0_36 = arith.constant 0 : index
    %148 = vector.load %arg9[%c0_35, %c0_36] : memref<16x66xf32, #tpu.memory_space<vmem>>, vector<16x66xf32>
    %cst_37 = arith.constant dense<0.000000e+00> : vector<16x66xf32>
    %149 = tpu.matmul %10, %147, %cst_37 {dimension_numbers = #tpu.dot_dimension_numbers<[0], [0], [1], [1], [0, 1, 1, 1], [], []>} : vector<16x16xf32>, vector<16x66xf32>, vector<16x66xf32> -> vector<16x66xf32>
    %150 = arith.addf %148, %149 : vector<16x66xf32>
    %c0_38 = arith.constant 0 : index
    %c0_39 = arith.constant 0 : index
    %151 = vector.load %arg9[%c0_38, %c0_39] : memref<16x66xf32, #tpu.memory_space<vmem>>, vector<16x66xf32>
    tpu.vector_store %arg9[%c0_38, %c0_39], %150 {strides = array<i32>} : memref<16x66xf32, #tpu.memory_space<vmem>>, vector<16x66xf32>,
    %c1_i32_40 = arith.constant 1 : i32
    %152 = arith.cmpi eq, %arg0, %c1_i32_40 : i32
    %153 = arith.extui %152 : i1 to i32
    %c0_i32_41 = arith.constant 0 : i32
    %154 = arith.cmpi ne, %153, %c0_i32_41 : i32
    scf.if %154 {
      %c0_42 = arith.constant 0 : index
      %c0_43 = arith.constant 0 : index
      %155 = vector.load %arg9[%c0_42, %c0_43] : memref<16x66xf32, #tpu.memory_space<vmem>>, vector<16x66xf32>
      %156 = vector.extract_strided_slice %155 {offsets = [0, 0], sizes = [16, 32], strides = [1, 1]} : vector<16x66xf32> to vector<16x32xf32>
      %157 = vector.extract_strided_slice %155 {offsets = [0, 32], sizes = [16, 1], strides = [1, 1]} : vector<16x66xf32> to vector<16x1xf32>
      %158 = vector.extract_strided_slice %155 {offsets = [0, 33], sizes = [16, 32], strides = [1, 1]} : vector<16x66xf32> to vector<16x32xf32>
      %159 = vector.extract_strided_slice %155 {offsets = [0, 65], sizes = [16, 1], strides = [1, 1]} : vector<16x66xf32> to vector<16x1xf32>
      %cst_44 = arith.constant 0.000000e+00 : f32
      %160 = vector.broadcast %cst_44 : f32 to vector<16x1xf32>
      %161 = arith.cmpf oeq, %157, %160 : vector<16x1xf32>
      %cst_45 = arith.constant 1.000000e+00 : f32
      %162 = vector.broadcast %cst_45 : f32 to vector<16x1xf32>
      %163 = arith.select %161, %162, %157 : vector<16x1xi1>, vector<16x1xf32>
      %cst_46 = arith.constant 0.000000e+00 : f32
      %164 = vector.broadcast %cst_46 : f32 to vector<16x1xf32>
      %165 = arith.cmpf oeq, %159, %164 : vector<16x1xf32>
      %cst_47 = arith.constant 1.000000e+00 : f32
      %166 = vector.broadcast %cst_47 : f32 to vector<16x1xf32>
      %167 = arith.select %165, %166, %159 : vector<16x1xi1>, vector<16x1xf32>
      %168 = vector.broadcast %163 : vector<16x1xf32> to vector<16x32xf32>
      %169 = arith.divf %156, %168 : vector<16x32xf32>
      %170 = vector.broadcast %167 : vector<16x1xf32> to vector<16x32xf32>
      %171 = arith.divf %158, %170 : vector<16x32xf32>
      %172 = arith.addf %169, %171 : vector<16x32xf32>
      %cst_48 = arith.constant 5.000000e-01 : f32
      %173 = vector.broadcast %cst_48 : f32 to vector<16x32xf32>
      %174 = arith.mulf %173, %172 : vector<16x32xf32>
      %c0_49 = arith.constant 0 : index
      %c0_50 = arith.constant 0 : index
      %175 = vector.load %arg8[%c0_49, %c0_50] : memref<16x32xf32, #tpu.memory_space<vmem>>, vector<16x32xf32>
      tpu.vector_store %arg8[%c0_49, %c0_50], %174 {strides = array<i32>} : memref<16x32xf32, #tpu.memory_space<vmem>>, vector<16x32xf32>,
    } else {
    }
    return
  }
  func.func @transform_0(%arg0: i32) -> (i32, i32) {
    %c0_i32 = arith.constant 0 : i32
    %c0_i32_0 = arith.constant 0 : i32
    return %arg0, %c0_i32 : i32, i32
  }
  func.func @transform_1(%arg0: i32) -> (i32, i32) {
    %c0_i32 = arith.constant 0 : i32
    %c0_i32_0 = arith.constant 0 : i32
    return %arg0, %c0_i32 : i32, i32
  }
  func.func @transform_2(%arg0: i32) -> (i32, i32) {
    %c0_i32 = arith.constant 0 : i32
    %c0_i32_0 = arith.constant 0 : i32
    return %arg0, %c0_i32 : i32, i32
  }
  func.func @transform_3(%arg0: i32) -> (i32, i32) {
    %c0_i32 = arith.constant 0 : i32
    %c0_i32_0 = arith.constant 0 : i32
    %c0_i32_1 = arith.constant 0 : i32
    return %c0_i32, %c0_i32_0 : i32, i32
  }
  func.func @transform_4(%arg0: i32) -> (i32, i32) {
    %c0_i32 = arith.constant 0 : i32
    %c0_i32_0 = arith.constant 0 : i32
    %c0_i32_1 = arith.constant 0 : i32
    return %c0_i32, %c0_i32_0 : i32, i32
  }
  func.func @transform_5(%arg0: i32) -> i32 {
    %c0_i32 = arith.constant 0 : i32
    %c0_i32_0 = arith.constant 0 : i32
    return %c0_i32 : i32
  }
  func.func @transform_6(%arg0: i32) -> i32 {
    %c0_i32 = arith.constant 0 : i32
    %c0_i32_0 = arith.constant 0 : i32
    return %c0_i32 : i32
  }
  func.func @transform_7(%arg0: i32) -> (i32, i32) {
    %c0_i32 = arith.constant 0 : i32
    %c0_i32_0 = arith.constant 0 : i32
    %c0_i32_1 = arith.constant 0 : i32
    return %c0_i32, %c0_i32_0 : i32, i32
  }
}

</mosaic_0001>

<llo_original>
// kernel: tpu_custom_call.1
$region0: #{tpu_custom_call.1}
  #allocation0 [shape = 'u32[]', space=smem, size = 0x4, offset = 0x4, fixed_abs, tag = 'smem constant byte address 0x4 - core index']
  #allocation1 [shape = 'u32[144,128]{1,0:T(1,128)}', space=vmem, size = 0x12000, scoped, tag = 'internal scratch']
  #allocation2 [shape = 'f32[16,66]{1,0:T(8,128)}', space=vmem, size = 0x2000, scoped, tag = 'scratch operand']
  #allocation3 [shape = 'f32[1]{0:T(128)S(6)}', space=smem, size = 0x200, scoped, tag = 'scoped memory for tpu_custom_call.1']
  %s0 = inlined_call_operand.vmem [shape: s32[32,1], index: 0, kind: input, shape index: {}]
  %s1 = inlined_call_operand.vmem [shape: s32[32,1], index: 1, kind: input, shape index: {}]
  %s2 = inlined_call_operand.vmem [shape: s32[32,1], index: 2, kind: input, shape index: {}]
  %s3 = inlined_call_operand.vmem [shape: f32[16,64], index: 3, kind: input, shape index: {}]
  %s4 = inlined_call_operand.vmem [shape: f32[16,97], index: 4, kind: input, shape index: {}]
  %s5 = inlined_call_operand.vmem [shape: f32[14], index: 5, kind: input, shape index: {}]
  %s6 = inlined_call_operand.<no memory space> [shape: f32[1], index: 6, kind: input, shape index: {}]
  %s7 = inlined_call_operand.hbm [shape: f32[16,32], index: 7, kind: output, shape index: {}]
  %s8 = sld [smem:[#allocation0]]
  $region73: #{tpu_custom_call.1} parent=0
    _
  %s10 = ssub.s32 1, %s8
  %s11 = scalar_select 0, %s10, %s8
  %12 = sst [smem:[#allocation3]] %s6
  $region1: #{tpu_custom_call.1} parent=0
    #allocation4 [shape = 'u8[512]{0}', space=smem, size = 0x200, scoped, tag = 'input window, operand 5, single buffered']
    #allocation5 [shape = 's32[2]{0}', space=sflag, size = 0x8, scoped, tag = 'scoped memory for tpu_custom_call.1']
    #allocation6 [shape = 's32[2]{0}', space=sflag, size = 0x8, scoped, tag = 'scoped memory for tpu_custom_call.1']
    #allocation7 [shape = 'u8[8192]{0}', space=vmem, size = 0x2000, scoped, tag = 'output window, operand 0, single buffered']
    %13 = vsyncpa [#allocation6], 0
    %14 = vsyncpa [#allocation5], 0
    loop: start=0, step=1, limit=4
    $region2: #{tpu_custom_call.1} parent=1 // loop_pre_header
      _
    $region3: #{tpu_custom_call.1} parent=1 // loop_header
      %s16 = sphi 0, %s20
      %p17 = scmp.ge.s32.totalorder %s16, 4
      %s26 = sphi 0, %s28
      %s29 = sphi 0, %s26
      %s30 = sphi 0, %s29
      %s46 = sphi 0, %s30
      %s52 = sphi 0, %s54
      %s55 = sphi 0, %s52
      %s56 = sphi 0, %s55
      %s72 = sphi 0, %s56
      %s78 = sphi 0, %s80
      %s81 = sphi 0, %s78
      %s82 = sphi 0, %s81
      %s98 = sphi 0, %s82
      %s102 = sphi 0, %s102
      %s104 = sphi 0, %s102
      %s105 = sphi 0, %s104
      %s119 = sphi 0, %s105
      %s123 = sphi 0, %s123
      %s125 = sphi 0, %s123
      %s126 = sphi 0, %s125
      %s140 = sphi 0, %s126
      %s144 = sphi 0, %s144
      %s146 = sphi 0, %s144
      %s147 = sphi 0, %s146
      %s161 = sphi 0, %s147
      %s165 = sphi 0, %s165
      %s167 = sphi 0, %s165
      %s168 = sphi 0, %s167
      %s182 = sphi 0, %s168
      %s186 = sphi 0, %s186
      %s188 = sphi 0, %s186
      %s189 = sphi 0, %s188
      %s203 = sphi 0, %s189
    $region4: #{tpu_custom_call.1} parent=1 // loop_header_branch
      %19 = sbr.rel (%p17) target = $region8
    $region5: #{tpu_custom_call.1} parent=1 // loop_body
      %s21 = ssub.s32 %s16, 1
      %s22 = ssub.s32 %s16, 2
      %s23 = sadd.s32 %s16, 1
      %s24 = ssub.s32 %s16, %s23
      %p25 = scmp.eq.s32.totalorder %s24, 0
      %s27 = sadd.s32 %s26, 1
      %s28 = scalar_select %p25, %s26, %s27
      %p31 = pneg %p25
      %p32 = scmp.eq.s32.totalorder %s16, 1
      %p33 = por %p31, %p32
      %p34 = scmp.ne.s32.totalorder %s26, %s29
      %p35 = scmp.eq.s32.totalorder %s16, 0
      %p36 = por %p34, %p35
      %p37 = scmp.ne.s32.totalorder %s26, %s29
      %p38 = scmp.eq.s32.totalorder %s21, 1
      %p39 = por %p37, %p38
      %p40 = scmp.ne.s32.totalorder %s29, %s30
      %p41 = scmp.eq.s32.totalorder %s21, 0
      %p42 = por %p40, %p41
      %p43 = scmp.ne.s32.totalorder %s29, %s30
      %p44 = scmp.eq.s32.totalorder %s22, 1
      %p45 = por %p43, %p44
      %p47 = scmp.ne.s32.totalorder %s30, %s46
      %p48 = scmp.eq.s32.totalorder %s22, 0
      %p49 = por %p47, %p48
      %s50 = ssub.s32 %s16, %s23
      %p51 = scmp.eq.s32.totalorder %s50, 0
      %s53 = sadd.s32 %s52, 1
      %s54 = scalar_select %p51, %s52, %s53
      %p57 = pneg %p51
      %p58 = scmp.eq.s32.totalorder %s16, 1
      %p59 = por %p57, %p58
      %p60 = scmp.ne.s32.totalorder %s52, %s55
      %p61 = scmp.eq.s32.totalorder %s16, 0
      %p62 = por %p60, %p61
      %p63 = scmp.ne.s32.totalorder %s52, %s55
      %p64 = scmp.eq.s32.totalorder %s21, 1
      %p65 = por %p63, %p64
      %p66 = scmp.ne.s32.totalorder %s55, %s56
      %p67 = scmp.eq.s32.totalorder %s21, 0
      %p68 = por %p66, %p67
      %p69 = scmp.ne.s32.totalorder %s55, %s56
      %p70 = scmp.eq.s32.totalorder %s22, 1
      %p71 = por %p69, %p70
      %p73 = scmp.ne.s32.totalorder %s56, %s72
      %p74 = scmp.eq.s32.totalorder %s22, 0
      %p75 = por %p73, %p74
      %s76 = ssub.s32 %s16, %s23
      %p77 = scmp.eq.s32.totalorder %s76, 0
      %s79 = sadd.s32 %s78, 1
      %s80 = scalar_select %p77, %s78, %s79
      %p83 = pneg %p77
      %p84 = scmp.eq.s32.totalorder %s16, 1
      %p85 = por %p83, %p84
      %p86 = scmp.ne.s32.totalorder %s78, %s81
      %p87 = scmp.eq.s32.totalorder %s16, 0
      %p88 = por %p86, %p87
      %p89 = scmp.ne.s32.totalorder %s78, %s81
      %p90 = scmp.eq.s32.totalorder %s21, 1
      %p91 = por %p89, %p90
      %p92 = scmp.ne.s32.totalorder %s81, %s82
      %p93 = scmp.eq.s32.totalorder %s21, 0
      %p94 = por %p92, %p93
      %p95 = scmp.ne.s32.totalorder %s81, %s82
      %p96 = scmp.eq.s32.totalorder %s22, 1
      %p97 = por %p95, %p96
      %p99 = scmp.ne.s32.totalorder %s82, %s98
      %p100 = scmp.eq.s32.totalorder %s22, 0
      %p101 = por %p99, %p100
      %s103 = sadd.s32 %s102, 1
      %p106 = scmp.eq.s32.totalorder %s16, 1
      %p107 = scmp.ne.s32.totalorder %s102, %s104
      %p108 = scmp.eq.s32.totalorder %s16, 0
      %p109 = por %p107, %p108
      %p110 = scmp.ne.s32.totalorder %s102, %s104
      %p111 = scmp.eq.s32.totalorder %s21, 1
      %p112 = por %p110, %p111
      %p113 = scmp.ne.s32.totalorder %s104, %s105
      %p114 = scmp.eq.s32.totalorder %s21, 0
      %p115 = por %p113, %p114
      %p116 = scmp.ne.s32.totalorder %s104, %s105
      %p117 = scmp.eq.s32.totalorder %s22, 1
      %p118 = por %p116, %p117
      %p120 = scmp.ne.s32.totalorder %s105, %s119
      %p121 = scmp.eq.s32.totalorder %s22, 0
      %p122 = por %p120, %p121
      %s124 = sadd.s32 %s123, 1
      %p127 = scmp.eq.s32.totalorder %s16, 1
      %p128 = scmp.ne.s32.totalorder %s123, %s125
      %p129 = scmp.eq.s32.totalorder %s16, 0
      %p130 = por %p128, %p129
      %p131 = scmp.ne.s32.totalorder %s123, %s125
      %p132 = scmp.eq.s32.totalorder %s21, 1
      %p133 = por %p131, %p132
      %p134 = scmp.ne.s32.totalorder %s125, %s126
      %p135 = scmp.eq.s32.totalorder %s21, 0
      %p136 = por %p134, %p135
      %p137 = scmp.ne.s32.totalorder %s125, %s126
      %p138 = scmp.eq.s32.totalorder %s22, 1
      %p139 = por %p137, %p138
      %p141 = scmp.ne.s32.totalorder %s126, %s140
      %p142 = scmp.eq.s32.totalorder %s22, 0
      %p143 = por %p141, %p142
      %s145 = sadd.s32 %s144, 1
      %p148 = scmp.eq.s32.totalorder %s16, 1
      %p149 = scmp.ne.s32.totalorder %s144, %s146
      %p150 = scmp.eq.s32.totalorder %s16, 0
      %p151 = por %p149, %p150
      %p152 = scmp.ne.s32.totalorder %s144, %s146
      %p153 = scmp.eq.s32.totalorder %s21, 1
      %p154 = por %p152, %p153
      %p155 = scmp.ne.s32.totalorder %s146, %s147
      %p156 = scmp.eq.s32.totalorder %s21, 0
      %p157 = por %p155, %p156
      %p158 = scmp.ne.s32.totalorder %s146, %s147
      %p159 = scmp.eq.s32.totalorder %s22, 1
      %p160 = por %p158, %p159
      %p162 = scmp.ne.s32.totalorder %s147, %s161
      %p163 = scmp.eq.s32.totalorder %s22, 0
      %p164 = por %p162, %p163
      %s166 = sadd.s32 %s165, 1
      %p169 = scmp.eq.s32.totalorder %s16, 1
      %p170 = scmp.ne.s32.totalorder %s165, %s167
      %p171 = scmp.eq.s32.totalorder %s16, 0
      %p172 = por %p170, %p171
      %p173 = scmp.ne.s32.totalorder %s165, %s167
      %p174 = scmp.eq.s32.totalorder %s21, 1
      %p175 = por %p173, %p174
      %p176 = scmp.ne.s32.totalorder %s167, %s168
      %p177 = scmp.eq.s32.totalorder %s21, 0
      %p178 = por %p176, %p177
      %p179 = scmp.ne.s32.totalorder %s167, %s168
      %p180 = scmp.eq.s32.totalorder %s22, 1
      %p181 = por %p179, %p180
      %p183 = scmp.ne.s32.totalorder %s168, %s182
      %p184 = scmp.eq.s32.totalorder %s22, 0
      %p185 = por %p183, %p184
      %s187 = sadd.s32 %s186, 1
      %p190 = scmp.eq.s32.totalorder %s16, 1
      %p191 = scmp.ne.s32.totalorder %s186, %s188
      %p192 = scmp.eq.s32.totalorder %s16, 0
      %p193 = por %p191, %p192
      %p194 = scmp.ne.s32.totalorder %s186, %s188
      %p195 = scmp.eq.s32.totalorder %s21, 1
      %p196 = por %p194, %p195
      %p197 = scmp.ne.s32.totalorder %s188, %s189
      %p198 = scmp.eq.s32.totalorder %s21, 0
      %p199 = por %p197, %p198
      %p200 = scmp.ne.s32.totalorder %s188, %s189
      %p201 = scmp.eq.s32.totalorder %s22, 1
      %p202 = por %p200, %p201
      %p204 = scmp.ne.s32.totalorder %s189, %s203
      %p205 = scmp.eq.s32.totalorder %s22, 0
      %p206 = por %p204, %p205
      %p207 = scmp.le.s32.totalorder 1, %s16
      %p208 = scmp.lt.s32.totalorder %s16, 3
      %p209 = pnand %p207, %p208
      %p210 = pneg %p209
      // Predicated region
      $region9: #{tpu_custom_call.1} parent=5 // pred_check
        _
      $region10: #{tpu_custom_call.1} parent=5 // pred_check_branch
        %212 = sbr.rel (%p209) target = $region12
      $region11: #{tpu_custom_call.1} parent=5 // pred_region
        %s213 = ssub.s32 %s16, 1
        // Predicated region
        $region13: #{tpu_custom_call.1} parent=11 // pred_check
          %p214 = pneg %p115
        $region14: #{tpu_custom_call.1} parent=11 // pred_check_branch
          %216 = sbr.rel (%p214) target = $region16
        $region15: #{tpu_custom_call.1} parent=11 // pred_region
          _
        $region16: #{tpu_custom_call.1} parent=11 // pred_fallthru
          _
        // Predicated region
        $region17: #{tpu_custom_call.1} parent=11 // pred_check
          %p217 = pneg %p136
        $region18: #{tpu_custom_call.1} parent=11 // pred_check_branch
          %219 = sbr.rel (%p217) target = $region20
        $region19: #{tpu_custom_call.1} parent=11 // pred_region
          _
        $region20: #{tpu_custom_call.1} parent=11 // pred_fallthru
          _
        // Predicated region
        $region21: #{tpu_custom_call.1} parent=11 // pred_check
          %p220 = pneg %p157
        $region22: #{tpu_custom_call.1} parent=11 // pred_check_branch
          %222 = sbr.rel (%p220) target = $region24
        $region23: #{tpu_custom_call.1} parent=11 // pred_region
          %s224 = ssub.s32 16, 16
          %225 = vsyncadd [#allocation6], %s224
          %s227 = sshll.u32 %s5, 4
          %s228 = int_to_ptr.vmem [resolvable:$true] %s227
          %230 = dma.vmem_to_smem %s228, 16, [#allocation4], [#allocation6]
        $region24: #{tpu_custom_call.1} parent=11 // pred_fallthru
          _
        // Predicated region
        $region25: #{tpu_custom_call.1} parent=11 // pred_check
          %p231 = pneg %p178
        $region26: #{tpu_custom_call.1} parent=11 // pred_check_branch
          %233 = sbr.rel (%p231) target = $region28
        $region27: #{tpu_custom_call.1} parent=11 // pred_region
          _
        $region28: #{tpu_custom_call.1} parent=11 // pred_fallthru
          _
      $region12: #{tpu_custom_call.1} parent=5 // pred_fallthru
        _
      %p234 = scmp.lt.s32.totalorder %s16, 2
      // Predicated region
      $region29: #{tpu_custom_call.1} parent=5 // pred_check
        %p235 = pneg %p234
      $region30: #{tpu_custom_call.1} parent=5 // pred_check_branch
        %237 = sbr.rel (%p235) target = $region32
      $region31: #{tpu_custom_call.1} parent=5 // pred_region
        // Predicated region
        $region33: #{tpu_custom_call.1} parent=31 // pred_check
          %p238 = pneg %p36
        $region34: #{tpu_custom_call.1} parent=31 // pred_check_branch
          %240 = sbr.rel (%p238) target = $region36
        $region35: #{tpu_custom_call.1} parent=31 // pred_region
          %s241 = smul.u32 2, %s16
          %p242 = scmp.lt.s32.totalorder %s241, 3
          %s243 = scalar_select %p242, %s241, 3
          %s244 = smul.addr %s243, 8
          %s245 = scalar_lea.vmem %s0, %s244
          %s246 = smul.u32 2, %s16
        $region36: #{tpu_custom_call.1} parent=31 // pred_fallthru
          _
        // Predicated region
        $region37: #{tpu_custom_call.1} parent=31 // pred_check
          %p247 = pneg %p62
        $region38: #{tpu_custom_call.1} parent=31 // pred_check_branch
          %249 = sbr.rel (%p247) target = $region40
        $region39: #{tpu_custom_call.1} parent=31 // pred_region
          %s250 = smul.u32 2, %s16
          %p251 = scmp.lt.s32.totalorder %s250, 3
          %s252 = scalar_select %p251, %s250, 3
          %s253 = smul.addr %s252, 8
          %s254 = scalar_lea.vmem %s1, %s253
          %s255 = smul.u32 2, %s16
        $region40: #{tpu_custom_call.1} parent=31 // pred_fallthru
          _
        // Predicated region
        $region41: #{tpu_custom_call.1} parent=31 // pred_check
          %p256 = pneg %p88
        $region42: #{tpu_custom_call.1} parent=31 // pred_check_branch
          %258 = sbr.rel (%p256) target = $region44
        $region43: #{tpu_custom_call.1} parent=31 // pred_region
          %s259 = smul.u32 2, %s16
          %p260 = scmp.lt.s32.totalorder %s259, 3
          %s261 = scalar_select %p260, %s259, 3
          %s262 = smul.addr %s261, 8
          %s263 = scalar_lea.vmem %s2, %s262
          %s264 = smul.u32 2, %s16
        $region44: #{tpu_custom_call.1} parent=31 // pred_fallthru
          _
      $region32: #{tpu_custom_call.1} parent=5 // pred_fallthru
        _
      %p265 = scmp.le.s32.totalorder 1, %s16
      %p266 = scmp.lt.s32.totalorder %s16, 3
      %p267 = pnand %p265, %p266
      %p268 = pneg %p267
      // Predicated region
      $region45: #{tpu_custom_call.1} parent=5 // pred_check
        _
      $region46: #{tpu_custom_call.1} parent=5 // pred_check_branch
        %270 = sbr.rel (%p267) target = $region48
      $region47: #{tpu_custom_call.1} parent=5 // pred_region
        %s271 = ssub.s32 %s16, 1
        // Predicated region
        $region49: #{tpu_custom_call.1} parent=47 // pred_check
          %p272 = pneg %p157
        $region50: #{tpu_custom_call.1} parent=47 // pred_check_branch
          %274 = sbr.rel (%p272) target = $region52
        $region51: #{tpu_custom_call.1} parent=47 // pred_region
          %275 = dma.done [#allocation6], 16
        $region52: #{tpu_custom_call.1} parent=47 // pred_fallthru
          _
        %276 = sfence
        %s277 = smul.u32 2, %s21
        %p278 = scmp.lt.s32.totalorder %s277, 3
        %s279 = scalar_select %p278, %s277, 3
        %s280 = smul.addr %s279, 8
        %s281 = scalar_lea.vmem %s0, %s280
        %p282 = pneg %p42
        %p283 = pneg %p39
        %s284 = smul.u32 2, %s21
        %p285 = scmp.lt.s32.totalorder %s284, 3
        %s286 = scalar_select %p285, %s284, 3
        %s287 = smul.addr %s286, 8
        %s288 = scalar_lea.vmem %s1, %s287
        %p289 = pneg %p68
        %p290 = pneg %p65
        %s291 = smul.u32 2, %s21
        %p292 = scmp.lt.s32.totalorder %s291, 3
        %s293 = scalar_select %p292, %s291, 3
        %s294 = smul.addr %s293, 8
        %s295 = scalar_lea.vmem %s2, %s294
        %p296 = pneg %p94
        %p297 = pneg %p91
        %p298 = pneg %p115
        %p299 = pneg %p112
        %p300 = pneg %p136
        %p301 = pneg %p133
        %p302 = pneg %p157
        %p303 = pneg %p154
        %p304 = pneg %p178
        %p305 = pneg %p175
        %p306 = pneg %p199
        %p307 = pneg %p196
        %s308 = smul.u32 2, %s21
        %p309 = scmp.lt.s32.totalorder %s308, 3
        %s310 = scalar_select %p309, %s308, 3
        %s311 = smul.addr %s310, 8
        %s312 = scalar_lea.vmem %s0, %s311
        %s313 = smul.u32 2, %s21
        %s314 = smul.u32 2, %s21
        %p315 = scmp.lt.s32.totalorder %s314, 3
        %s316 = scalar_select %p315, %s314, 3
        %s317 = smul.addr %s316, 8
        %s318 = scalar_lea.vmem %s1, %s317
        %s319 = smul.u32 2, %s21
        %s320 = smul.u32 2, %s21
        %p321 = scmp.lt.s32.totalorder %s320, 3
        %s322 = scalar_select %p321, %s320, 3
        %s323 = smul.addr %s322, 8
        %s324 = scalar_lea.vmem %s2, %s323
        %s325 = smul.u32 2, %s21
        %p326 = scmp.eq.s32.totalorder %s21, 0
        // Predicated region
        $region53: #{tpu_custom_call.1} parent=47 // pred_check
          %p327 = pneg %p326
        $region54: #{tpu_custom_call.1} parent=47 // pred_check_branch
          %329 = sbr.rel (%p327) target = $region56
        $region55: #{tpu_custom_call.1} parent=47 // pred_region
          %vm330 = vcmask 539648
          %331 = vst.msk [vmem:[#allocation2] sm:$0xff] %vm330, 0.0
          %332 = vst.msk [vmem:[#allocation2 + $0x8] sm:$0xff] %vm330, 0.0
        $region56: #{tpu_custom_call.1} parent=47 // pred_fallthru
          _
        %v333 = vld [vmem:[%s312] sm:$0xff]
        %v334 = vld [vmem:[%s312 + $0x8] sm:$0xff]
        %v335 = vld [vmem:[%s318] sm:$0xff]
        %v336 = vld [vmem:[%s318 + $0x8] sm:$0xff]
        %v337 = vld [vmem:[%s324] sm:$0xff]
        %v338 = vld [vmem:[%s324 + $0x8] sm:$0xff]
        %v339 = vlaneseq
        %v340 = vand.u32 %v339, 127
        %341 = vset.pattern.permute.xlu0 0
        %342 = vperm.xlu0 %341, %v333
        %v343 = vpop.permute.xlu0 %342
        %344 = vset.pattern.permute.xlu0 0
        %345 = vperm.xlu0 %344, %v334
        %v346 = vpop.permute.xlu0 %345
        %vm347 = vcmp.eq.s32.totalorder %v343, %v340
        %vm348 = vcmp.eq.s32.totalorder %v346, %v340
        %v349 = vsel %vm347, 1, 0
        %v350 = vsel %vm348, 1, 0
        %v351 = vcvt.s32.f32 %v349
        %v352 = vcvt.s32.f32 %v350
        %353 = vset.pattern.permute.xlu0 0
        %354 = vperm.xlu0 %353, %v335
        %v355 = vpop.permute.xlu0 %354
        %356 = vset.pattern.permute.xlu0 0
        %357 = vperm.xlu0 %356, %v336
        %v358 = vpop.permute.xlu0 %357
        %vm359 = vcmp.eq.s32.totalorder %v355, %v340
        %vm360 = vcmp.eq.s32.totalorder %v358, %v340
        %v361 = vsel %vm359, 1, 0
        %v362 = vsel %vm360, 1, 0
        %v363 = vcvt.s32.f32 %v361
        %v364 = vcvt.s32.f32 %v362
        %v365 = vld [vmem:[%s3] sm:$0xff]
        %v366 = vld [vmem:[%s3 + $0x8] sm:$0xff]
        %vm367 = vcmask 130048
        %v369 = vsel %vm367, %v351, 0
        %v372 = vsel %vm367, %v352, 0
        %374 = vmatprep.subr.mxu0 0.0
        %375 = vmatpush1.msra.mxu0 %v365
        %376 = vmatprep.subr.mxu0 0.0
        %377 = vmatpush1.msra.mxu0 %v366
        %378 = vmatprep.subr.mxu0 0.0
        %379 = vmatpush1.msra.mxu0 0.0
        %380 = vmatprep.subr.mxu0 0.0
        %381 = vmatpush1.msra.mxu0 0.0
        %382 = vmatprep.subr.mxu0 0.0
        %383 = vmatpush1.msra.mxu0 0.0
        %384 = vmatprep.subr.mxu0 0.0
        %385 = vmatpush1.msra.mxu0 0.0
        %386 = vmatprep.subr.mxu0 0.0
        %387 = vmatpush1.msra.mxu0 0.0
        %388 = vmatprep.subr.mxu0 0.0
        %389 = vmatpush1.msra.mxu0 0.0
        %390 = vmatprep.subr.mxu0 0.0
        %391 = vmatpush1.msra.mxu0 0.0
        %392 = vmatprep.subr.mxu0 0.0
        %393 = vmatpush1.msra.mxu0 0.0
        %394 = vmatprep.subr.mxu0 0.0
        %395 = vmatpush1.msra.mxu0 0.0
        %396 = vmatprep.subr.mxu0 0.0
        %397 = vmatpush1.msra.mxu0 0.0
        %398 = vmatprep.subr.mxu0 0.0
        %399 = vmatpush1.msra.mxu0 0.0
        %400 = vmatprep.subr.mxu0 0.0
        %401 = vmatpush1.msra.mxu0 0.0
        %402 = vmatprep.subr.mxu0 0.0
        %403 = vmatpush1.msra.mxu0 0.0
        %404 = vmatprep.subr.mxu0 0.0
        %405 = vmatpush1.msra.mxu0 0.0
        %406 = vmatprep.subr.mxu0 0.0
        %407 = vmatpush1.msra.mxu0 0.0
        %408 = vmatprep.subr.mxu0 0.0
        %409 = vmatpush1.msra.mxu0 0.0
        %410 = vmatprep.subr.mxu0 0.0
        %411 = vmatpush1.msra.mxu0 0.0
        %412 = vmatprep.subr.mxu0 0.0
        %413 = vmatpush1.msra.mxu0 0.0
        %414 = vmatprep.subr.mxu0 0.0
        %415 = vmatpush1.msra.mxu0 0.0
        %416 = vmatprep.subr.mxu0 0.0
        %417 = vmatpush1.msra.mxu0 0.0
        %418 = vmatprep.subr.mxu0 0.0
        %419 = vmatpush1.msra.mxu0 0.0
        %420 = vmatprep.subr.mxu0 0.0
        %421 = vmatpush1.msra.mxu0 0.0
        %422 = vmatprep.subr.mxu0 0.0
        %423 = vmatpush1.msra.mxu0 0.0
        %424 = vmatprep.subr.mxu0 0.0
        %425 = vmatpush1.msra.mxu0 0.0
        %426 = vmatprep.subr.mxu0 0.0
        %427 = vmatpush1.msra.mxu0 0.0
        %428 = vmatprep.subr.mxu0 0.0
        %429 = vmatpush1.msra.mxu0 0.0
        %430 = vmatprep.subr.mxu0 0.0
        %431 = vmatpush1.msra.mxu0 0.0
        %432 = vmatprep.subr.mxu0 0.0
        %433 = vmatpush1.msra.mxu0 0.0
        %434 = vmatprep.subr.mxu0 0.0
        %435 = vmatpush1.msra.mxu0 0.0
        %436 = vmatprep.subr.mxu0 0.0
        %437 = vmatpush1.msra.mxu0 0.0
        %438 = vmatprep.mubr.f32.mxu0 0.0
        %439 = vmatmul.mubr.f32.gmra.mrb[0].mxu0 %v369
        %v440 = vpop.f32.mrb[0].mxu0
        %v441 = vadd.f32 0.0, %v440
        %v442 = vpop.f32.mrb[0].mxu0
        %443 = vmatprep.mubr.f32.mxu0 0.0
        %444 = vmatmul.mubr.f32.gmra.mrb[0].mxu0 %v372
        %v445 = vpop.f32.mrb[0].mxu0
        %v446 = vadd.f32 0.0, %v445
        %v447 = vpop.f32.mrb[0].mxu0
        %448 = vdwg.mxu0
        %v449 = vld [vmem:[%s4] sm:$0xff]
        %v450 = vld [vmem:[%s4 + $0x8] sm:$0xff]
        %v452 = vsel %vm367, %v363, 0
        %v455 = vsel %vm367, %v364, 0
        %457 = vmatprep.subr.mxu0 0.0
        %458 = vmatpush1.msra.mxu0 %v449
        %459 = vmatprep.subr.mxu0 0.0
        %460 = vmatpush1.msra.mxu0 %v450
        %461 = vmatprep.subr.mxu0 0.0
        %462 = vmatpush1.msra.mxu0 0.0
        %463 = vmatprep.subr.mxu0 0.0
        %464 = vmatpush1.msra.mxu0 0.0
        %465 = vmatprep.subr.mxu0 0.0
        %466 = vmatpush1.msra.mxu0 0.0
        %467 = vmatprep.subr.mxu0 0.0
        %468 = vmatpush1.msra.mxu0 0.0
        %469 = vmatprep.subr.mxu0 0.0
        %470 = vmatpush1.msra.mxu0 0.0
        %471 = vmatprep.subr.mxu0 0.0
        %472 = vmatpush1.msra.mxu0 0.0
        %473 = vmatprep.subr.mxu0 0.0
        %474 = vmatpush1.msra.mxu0 0.0
        %475 = vmatprep.subr.mxu0 0.0
        %476 = vmatpush1.msra.mxu0 0.0
        %477 = vmatprep.subr.mxu0 0.0
        %478 = vmatpush1.msra.mxu0 0.0
        %479 = vmatprep.subr.mxu0 0.0
        %480 = vmatpush1.msra.mxu0 0.0
        %481 = vmatprep.subr.mxu0 0.0
        %482 = vmatpush1.msra.mxu0 0.0
        %483 = vmatprep.subr.mxu0 0.0
        %484 = vmatpush1.msra.mxu0 0.0
        %485 = vmatprep.subr.mxu0 0.0
        %486 = vmatpush1.msra.mxu0 0.0
        %487 = vmatprep.subr.mxu0 0.0
        %488 = vmatpush1.msra.mxu0 0.0
        %489 = vmatprep.subr.mxu0 0.0
        %490 = vmatpush1.msra.mxu0 0.0
        %491 = vmatprep.subr.mxu0 0.0
        %492 = vmatpush1.msra.mxu0 0.0
        %493 = vmatprep.subr.mxu0 0.0
        %494 = vmatpush1.msra.mxu0 0.0
        %495 = vmatprep.subr.mxu0 0.0
        %496 = vmatpush1.msra.mxu0 0.0
        %497 = vmatprep.subr.mxu0 0.0
        %498 = vmatpush1.msra.mxu0 0.0
        %499 = vmatprep.subr.mxu0 0.0
        %500 = vmatpush1.msra.mxu0 0.0
        %501 = vmatprep.subr.mxu0 0.0
        %502 = vmatpush1.msra.mxu0 0.0
        %503 = vmatprep.subr.mxu0 0.0
        %504 = vmatpush1.msra.mxu0 0.0
        %505 = vmatprep.subr.mxu0 0.0
        %506 = vmatpush1.msra.mxu0 0.0
        %507 = vmatprep.subr.mxu0 0.0
        %508 = vmatpush1.msra.mxu0 0.0
        %509 = vmatprep.subr.mxu0 0.0
        %510 = vmatpush1.msra.mxu0 0.0
        %511 = vmatprep.subr.mxu0 0.0
        %512 = vmatpush1.msra.mxu0 0.0
        %513 = vmatprep.subr.mxu0 0.0
        %514 = vmatpush1.msra.mxu0 0.0
        %515 = vmatprep.subr.mxu0 0.0
        %516 = vmatpush1.msra.mxu0 0.0
        %517 = vmatprep.subr.mxu0 0.0
        %518 = vmatpush1.msra.mxu0 0.0
        %519 = vmatprep.subr.mxu0 0.0
        %520 = vmatpush1.msra.mxu0 0.0
        %521 = vmatprep.mubr.f32.mxu0 0.0
        %522 = vmatmul.mubr.f32.gmra.mrb[0].mxu0 %v452
        %v523 = vpop.f32.mrb[0].mxu0
        %v524 = vadd.f32 0.0, %v523
        %v525 = vpop.f32.mrb[0].mxu0
        %526 = vmatprep.mubr.f32.mxu0 0.0
        %527 = vmatmul.mubr.f32.gmra.mrb[0].mxu0 %v455
        %v528 = vpop.f32.mrb[0].mxu0
        %v529 = vadd.f32 0.0, %v528
        %v530 = vpop.f32.mrb[0].mxu0
        %531 = vdwg.mxu0
        %s532 = sld [smem:[#allocation3]]
        %v533 = vstv %s532
        %v534 = vmul.f32 %v533, 1.442695
        %v535 = vpow.pop %v534
        %vm536 = vcmp.lt.s32.totalorder %v340, 32
        %v537 = vsel %vm536, 0.17677669, %v535
        %v538 = vmul.f32 %v441, %v524
        %v539 = vmul.f32 %v446, %v529
        %v540 = vmul.f32 %v538, %v537
        %v541 = vmul.f32 %v539, %v537
        %vm542 = vcmask 523264
        %v543 = vsel %vm542, %v540, 0.0
        %544 = vadd.xlane.f32.xlu0 %v543
        %v545 = vpop.xlane.xlu0 %544
        %v546 = vsel %vm542, %v541, 0.0
        %547 = vadd.xlane.f32.xlu0 %v546
        %v548 = vpop.xlane.xlu0 %547
        %vm549 = vcmp.eq.s32.totalorder %v337, 0
        %vm550 = vcmp.eq.s32.totalorder %v338, 0
        %s551 = sld [smem:[#allocation4]]
        %v552 = vstv %s551
        %v553 = vsel %vm549, %v552, 0.0
        %v554 = vsel %vm550, %v552, 0.0
        %v555 = vadd.f32 %v553, 0.0
        %v556 = vadd.f32 %v554, 0.0
        %vm557 = vcmp.eq.s32.totalorder %v337, 1
        %vm558 = vcmp.eq.s32.totalorder %v338, 1
        %s559 = sld [smem:[#allocation4 + $0x1]]
        %v560 = vstv %s559
        %v561 = vsel %vm557, %v560, 0.0
        %v562 = vsel %vm558, %v560, 0.0
        %v563 = vadd.f32 %v555, %v561
        %v564 = vadd.f32 %v556, %v562
        %vm565 = vcmp.eq.s32.totalorder %v337, 2
        %vm566 = vcmp.eq.s32.totalorder %v338, 2
        %s567 = sld [smem:[#allocation4 + $0x2]]
        %v568 = vstv %s567
        %v569 = vsel %vm565, %v568, 0.0
        %v570 = vsel %vm566, %v568, 0.0
        %v571 = vadd.f32 %v563, %v569
        %v572 = vadd.f32 %v564, %v570
        %vm573 = vcmp.eq.s32.totalorder %v337, 3
        %vm574 = vcmp.eq.s32.totalorder %v338, 3
        %s575 = sld [smem:[#allocation4 + $0x3]]
        %v576 = vstv %s575
        %v577 = vsel %vm573, %v576, 0.0
        %v578 = vsel %vm574, %v576, 0.0
        %v579 = vadd.f32 %v571, %v577
        %v580 = vadd.f32 %v572, %v578
        %vm581 = vcmp.eq.s32.totalorder %v337, 4
        %vm582 = vcmp.eq.s32.totalorder %v338, 4
        %s583 = sld [smem:[#allocation4 + $0x4]]
        %v584 = vstv %s583
        %v585 = vsel %vm581, %v584, 0.0
        %v586 = vsel %vm582, %v584, 0.0
        %v587 = vadd.f32 %v579, %v585
        %v588 = vadd.f32 %v580, %v586
        %vm589 = vcmp.eq.s32.totalorder %v337, 5
        %vm590 = vcmp.eq.s32.totalorder %v338, 5
        %s591 = sld [smem:[#allocation4 + $0x5]]
        %v592 = vstv %s591
        %v593 = vsel %vm589, %v592, 0.0
        %v594 = vsel %vm590, %v592, 0.0
        %v595 = vadd.f32 %v587, %v593
        %v596 = vadd.f32 %v588, %v594
        %vm597 = vcmp.eq.s32.totalorder %v337, 6
        %vm598 = vcmp.eq.s32.totalorder %v338, 6
        %s599 = sld [smem:[#allocation4 + $0x6]]
        %v600 = vstv %s599
        %v601 = vsel %vm597, %v600, 0.0
        %v602 = vsel %vm598, %v600, 0.0
        %v603 = vadd.f32 %v595, %v601
        %v604 = vadd.f32 %v596, %v602
        %vm605 = vcmp.eq.s32.totalorder %v337, 7
        %vm606 = vcmp.eq.s32.totalorder %v338, 7
        %s607 = sld [smem:[#allocation4 + $0x7]]
        %v608 = vstv %s607
        %v609 = vsel %vm605, %v608, 0.0
        %v610 = vsel %vm606, %v608, 0.0
        %v611 = vadd.f32 %v603, %v609
        %v612 = vadd.f32 %v604, %v610
        %vm613 = vcmp.eq.s32.totalorder %v337, 8
        %vm614 = vcmp.eq.s32.totalorder %v338, 8
        %s615 = sld [smem:[#allocation4 + $0x8]]
        %v616 = vstv %s615
        %v617 = vsel %vm613, %v616, 0.0
        %v618 = vsel %vm614, %v616, 0.0
        %v619 = vadd.f32 %v611, %v617
        %v620 = vadd.f32 %v612, %v618
        %vm621 = vcmp.eq.s32.totalorder %v337, 9
        %vm622 = vcmp.eq.s32.totalorder %v338, 9
        %s623 = sld [smem:[#allocation4 + $0x9]]
        %v624 = vstv %s623
        %v625 = vsel %vm621, %v624, 0.0
        %v626 = vsel %vm622, %v624, 0.0
        %v627 = vadd.f32 %v619, %v625
        %v628 = vadd.f32 %v620, %v626
        %vm629 = vcmp.eq.s32.totalorder %v337, 10
        %vm630 = vcmp.eq.s32.totalorder %v338, 10
        %s631 = sld [smem:[#allocation4 + $0xa]]
        %v632 = vstv %s631
        %v633 = vsel %vm629, %v632, 0.0
        %v634 = vsel %vm630, %v632, 0.0
        %v635 = vadd.f32 %v627, %v633
        %v636 = vadd.f32 %v628, %v634
        %vm637 = vcmp.eq.s32.totalorder %v337, 11
        %vm638 = vcmp.eq.s32.totalorder %v338, 11
        %s639 = sld [smem:[#allocation4 + $0xb]]
        %v640 = vstv %s639
        %v641 = vsel %vm637, %v640, 0.0
        %v642 = vsel %vm638, %v640, 0.0
        %v643 = vadd.f32 %v635, %v641
        %v644 = vadd.f32 %v636, %v642
        %vm645 = vcmp.eq.s32.totalorder %v337, 12
        %vm646 = vcmp.eq.s32.totalorder %v338, 12
        %s647 = sld [smem:[#allocation4 + $0xc]]
        %v648 = vstv %s647
        %v649 = vsel %vm645, %v648, 0.0
        %v650 = vsel %vm646, %v648, 0.0
        %v651 = vadd.f32 %v643, %v649
        %v652 = vadd.f32 %v644, %v650
        %vm653 = vcmp.eq.s32.totalorder %v337, 13
        %vm654 = vcmp.eq.s32.totalorder %v338, 13
        %s655 = sld [smem:[#allocation4 + $0xd]]
        %v656 = vstv %s655
        %v657 = vsel %vm653, %v656, 0.0
        %v658 = vsel %vm654, %v656, 0.0
        %v659 = vadd.f32 %v651, %v657
        %v660 = vadd.f32 %v652, %v658
        %v661 = vmul.f32 %v545, 1.442695
        %v662 = vpow.pop %v661
        %v663 = vmul.f32 %v548, 1.442695
        %v664 = vpow.pop %v663
        %v665 = vmax.f32 %v662, -5.0
        %v666 = vmax.f32 %v664, -5.0
        %v667 = vmin.f32 %v665, 5.0
        %v668 = vmin.f32 %v666, 5.0
        %v669 = vmul.f32 %v659, 1.442695
        %v670 = vpow.pop %v669
        %v671 = vmul.f32 %v660, 1.442695
        %v672 = vpow.pop %v671
        %v673 = vmax.f32 %v670, -5.0
        %v674 = vmax.f32 %v672, -5.0
        %v675 = vmin.f32 %v673, 5.0
        %v676 = vmin.f32 %v674, 5.0
        %v677 = vmul.f32 %v524, %v667
        %v678 = vmul.f32 %v529, %v668
        %680 = vset.pattern.permute.xlu0 0
        %681 = vperm.xlu0 %680, %v675
        %v682 = vpop.permute.xlu0 %681
        %685 = vset.pattern.permute.xlu0 0
        %686 = vperm.xlu0 %685, %v676
        %v687 = vpop.permute.xlu0 %686
        %v689 = vmul.f32 %v524, %v682
        %v690 = vmul.f32 %v529, %v687
        %693 = vrot.lane.b32.xlu0 %v677, 64
        %v694 = vpop.permute.xlu0 %693
        %695 = vrot.lane.b32.xlu0 %v678, 64
        %v696 = vpop.permute.xlu0 %695
        %701 = vrot.lane.b32.xlu0 %v689, 97
        %v702 = vpop.permute.xlu0 %701
        %703 = vrot.lane.b32.xlu0 %v690, 97
        %v704 = vpop.permute.xlu0 %703
        %vm707 = vcmask 269312
        %v708 = vsel %vm707, %v694, %v702
        %v709 = vsel %vm707, %v696, %v704
        %v710 = vld [vmem:[#allocation2] sm:$0xff]
        %v711 = vld [vmem:[#allocation2 + $0x8] sm:$0xff]
        %712 = vxpose.xlu0.b32.start [1/16] %v351, 128
        %713 = vxpose.xlu0.b32.cont [2/16] %v352, 128
        %714 = vxpose.xlu0.b32.cont [3/16] 0.0, 128
        %715 = vxpose.xlu0.b32.cont [4/16] 0.0, 128
        %716 = vxpose.xlu0.b32.cont [5/16] 0.0, 128
        %717 = vxpose.xlu0.b32.cont [6/16] 0.0, 128
        %718 = vxpose.xlu0.b32.cont [7/16] 0.0, 128
        %719 = vxpose.xlu0.b32.cont [8/16] 0.0, 128
        %720 = vxpose.xlu0.b32.cont [9/16] 0.0, 128
        %721 = vxpose.xlu0.b32.cont [10/16] 0.0, 128
        %722 = vxpose.xlu0.b32.cont [11/16] 0.0, 128
        %723 = vxpose.xlu0.b32.cont [12/16] 0.0, 128
        %724 = vxpose.xlu0.b32.cont [13/16] 0.0, 128
        %725 = vxpose.xlu0.b32.cont [14/16] 0.0, 128
        %726 = vxpose.xlu0.b32.cont [15/16] 0.0, 128
        %727 = vxpose.xlu0.b32.end [16/16] 0.0, 128
        %v728 = vpop.trf.xlu0
        %v729 = vpop.trf.xlu0
        %v730 = vpop.trf.xlu0
        %v731 = vpop.trf.xlu0
        %v732 = vpop.trf.xlu0
        %v733 = vpop.trf.xlu0
        %v734 = vpop.trf.xlu0
        %v735 = vpop.trf.xlu0
        %v736 = vpop.trf.xlu0
        %v737 = vpop.trf.xlu0
        %v738 = vpop.trf.xlu0
        %v739 = vpop.trf.xlu0
        %v740 = vpop.trf.xlu0
        %v741 = vpop.trf.xlu0
        %v742 = vpop.trf.xlu0
        %v743 = vpop.trf.xlu0
        %v745 = vsel %vm367, %v728, 0
        %v748 = vsel %vm367, %v729, 0
        %750 = vmatprep.subr.mxu0 0.0
        %751 = vmatpush1.msra.mxu0 %v708
        %752 = vmatprep.subr.mxu0 0.0
        %753 = vmatpush1.msra.mxu0 %v709
        %754 = vmatprep.subr.mxu0 0.0
        %755 = vmatpush1.msra.mxu0 0.0
        %756 = vmatprep.subr.mxu0 0.0
        %757 = vmatpush1.msra.mxu0 0.0
        %758 = vmatprep.subr.mxu0 0.0
        %759 = vmatpush1.msra.mxu0 0.0
        %760 = vmatprep.subr.mxu0 0.0
        %761 = vmatpush1.msra.mxu0 0.0
        %762 = vmatprep.subr.mxu0 0.0
        %763 = vmatpush1.msra.mxu0 0.0
        %764 = vmatprep.subr.mxu0 0.0
        %765 = vmatpush1.msra.mxu0 0.0
        %766 = vmatprep.subr.mxu0 0.0
        %767 = vmatpush1.msra.mxu0 0.0
        %768 = vmatprep.subr.mxu0 0.0
        %769 = vmatpush1.msra.mxu0 0.0
        %770 = vmatprep.subr.mxu0 0.0
        %771 = vmatpush1.msra.mxu0 0.0
        %772 = vmatprep.subr.mxu0 0.0
        %773 = vmatpush1.msra.mxu0 0.0
        %774 = vmatprep.subr.mxu0 0.0
        %775 = vmatpush1.msra.mxu0 0.0
        %776 = vmatprep.subr.mxu0 0.0
        %777 = vmatpush1.msra.mxu0 0.0
        %778 = vmatprep.subr.mxu0 0.0
        %779 = vmatpush1.msra.mxu0 0.0
        %780 = vmatprep.subr.mxu0 0.0
        %781 = vmatpush1.msra.mxu0 0.0
        %782 = vmatprep.subr.mxu0 0.0
        %783 = vmatpush1.msra.mxu0 0.0
        %784 = vmatprep.subr.mxu0 0.0
        %785 = vmatpush1.msra.mxu0 0.0
        %786 = vmatprep.subr.mxu0 0.0
        %787 = vmatpush1.msra.mxu0 0.0
        %788 = vmatprep.subr.mxu0 0.0
        %789 = vmatpush1.msra.mxu0 0.0
        %790 = vmatprep.subr.mxu0 0.0
        %791 = vmatpush1.msra.mxu0 0.0
        %792 = vmatprep.subr.mxu0 0.0
        %793 = vmatpush1.msra.mxu0 0.0
        %794 = vmatprep.subr.mxu0 0.0
        %795 = vmatpush1.msra.mxu0 0.0
        %796 = vmatprep.subr.mxu0 0.0
        %797 = vmatpush1.msra.mxu0 0.0
        %798 = vmatprep.subr.mxu0 0.0
        %799 = vmatpush1.msra.mxu0 0.0
        %800 = vmatprep.subr.mxu0 0.0
        %801 = vmatpush1.msra.mxu0 0.0
        %802 = vmatprep.subr.mxu0 0.0
        %803 = vmatpush1.msra.mxu0 0.0
        %804 = vmatprep.subr.mxu0 0.0
        %805 = vmatpush1.msra.mxu0 0.0
        %806 = vmatprep.subr.mxu0 0.0
        %807 = vmatpush1.msra.mxu0 0.0
        %808 = vmatprep.subr.mxu0 0.0
        %809 = vmatpush1.msra.mxu0 0.0
        %810 = vmatprep.subr.mxu0 0.0
        %811 = vmatpush1.msra.mxu0 0.0
        %812 = vmatprep.subr.mxu0 0.0
        %813 = vmatpush1.msra.mxu0 0.0
        %814 = vmatprep.mubr.f32.mxu0 0.0
        %815 = vmatmul.mubr.f32.gmra.mrb[0].mxu0 %v745
        %v816 = vpop.f32.mrb[0].mxu0
        %v817 = vadd.f32 0.0, %v816
        %v818 = vpop.f32.mrb[0].mxu0
        %819 = vmatprep.mubr.f32.mxu0 0.0
        %820 = vmatmul.mubr.f32.gmra.mrb[0].mxu0 %v748
        %v821 = vpop.f32.mrb[0].mxu0
        %v822 = vadd.f32 0.0, %v821
        %v823 = vpop.f32.mrb[0].mxu0
        %824 = vdwg.mxu0
        %v825 = vadd.f32 %v710, %v817
        %v826 = vadd.f32 %v711, %v822
        %vm827 = vcmask 539648
        %828 = vst.msk [vmem:[#allocation2] sm:$0xff] %vm827, %v825
        %829 = vst.msk [vmem:[#allocation2 + $0x8] sm:$0xff] %vm827, %v826
        %p830 = scmp.eq.s32.totalorder %s21, 1
        // Predicated region
        $region57: #{tpu_custom_call.1} parent=47 // pred_check
          %p831 = pneg %p830
        $region58: #{tpu_custom_call.1} parent=47 // pred_check_branch
          %833 = sbr.rel (%p831) target = $region60
        $region59: #{tpu_custom_call.1} parent=47 // pred_region
          %v834 = vld [vmem:[#allocation2] sm:$0xff]
          %v835 = vld [vmem:[#allocation2 + $0x8] sm:$0xff]
          %vm836 = vcmp.eq.f32.partialorder %v834, 0.0
          %vm837 = vcmp.eq.f32.partialorder %v835, 0.0
          %v838 = vsel %vm836, 1.0, %v834
          %v839 = vsel %vm837, 1.0, %v835
          %841 = vset.pattern.permute.xlu0 32
          %842 = vperm.xlu0 %841, %v838
          %v843 = vpop.permute.xlu0 %842
          %846 = vset.pattern.permute.xlu0 32
          %847 = vperm.xlu0 %846, %v839
          %v848 = vpop.permute.xlu0 %847
          %v850 = vrcp.pop %v843
          %v851 = vmul.f32 %v834, %v850
          %v852 = vrcp.pop %v848
          %v853 = vmul.f32 %v835, %v852
          %854 = vset.pattern.permute.xlu0 65
          %855 = vperm.xlu0 %854, %v838
          %v856 = vpop.permute.xlu0 %855
          %858 = vset.pattern.permute.xlu0 65
          %859 = vperm.xlu0 %858, %v839
          %v860 = vpop.permute.xlu0 %859
          %v862 = vrcp.pop %v856
          %v863 = vmul.f32 %v834, %v862
          %v864 = vrcp.pop %v860
          %v865 = vmul.f32 %v835, %v864
          %868 = vrot.lane.b32.xlu0 %v863, 95
          %v869 = vpop.permute.xlu0 %868
          %870 = vrot.lane.b32.xlu0 %v865, 95
          %v871 = vpop.permute.xlu0 %870
          %v874 = vadd.f32 %v851, %v869
          %v875 = vadd.f32 %v853, %v871
          %v876 = vmul.f32 %v874, 0.5
          %v877 = vmul.f32 %v875, 0.5
          %vm878 = vcmask 261120
          %879 = vst.msk [vmem:[#allocation7] sm:$0xff] %vm878, %v876
          %880 = vst.msk [vmem:[#allocation7 + $0x8] sm:$0xff] %vm878, %v877
        $region60: #{tpu_custom_call.1} parent=47 // pred_fallthru
          _
        // Predicated region
        $region61: #{tpu_custom_call.1} parent=47 // pred_check
          %p881 = pneg %p196
        $region62: #{tpu_custom_call.1} parent=47 // pred_check_branch
          %883 = sbr.rel (%p881) target = $region64
        $region63: #{tpu_custom_call.1} parent=47 // pred_region
          %s885 = ssub.s32 256, 256
          %886 = vsyncadd [#allocation5], %s885
          %s887 = sshll.u32 [#allocation7], 4
          %s888 = int_to_ptr.vmem [resolvable:$true] %s887
          %893 = dma.vmem_to_hbm [thread:$0]  %s888, 256, %s7, [#allocation5], 128, 128, 8
        $region64: #{tpu_custom_call.1} parent=47 // pred_fallthru
          _
        // Predicated region
        $region65: #{tpu_custom_call.1} parent=47 // pred_check
          %p894 = pneg %p196
        $region66: #{tpu_custom_call.1} parent=47 // pred_check_branch
          %896 = sbr.rel (%p894) target = $region68
        $region67: #{tpu_custom_call.1} parent=47 // pred_region
          %897 = dma.done [#allocation5], 256
        $region68: #{tpu_custom_call.1} parent=47 // pred_fallthru
          _
      $region48: #{tpu_custom_call.1} parent=5 // pred_fallthru
        _
      %p898 = scmp.le.s32.totalorder 2, %s16
      // Predicated region
      $region69: #{tpu_custom_call.1} parent=5 // pred_check
        %p899 = pneg %p898
      $region70: #{tpu_custom_call.1} parent=5 // pred_check_branch
        %901 = sbr.rel (%p899) target = $region72
      $region71: #{tpu_custom_call.1} parent=5 // pred_region
        %s902 = ssub.s32 %s16, 2
      $region72: #{tpu_custom_call.1} parent=5 // pred_fallthru
        _
    $region6: #{tpu_custom_call.1} parent=1 // loop_footer
      %s20 = sadd.s32 1, %s16
    $region7: #{tpu_custom_call.1} parent=1 // loop_footer_branch
      %15 = sbr.rel target = $region3
    $region8: #{tpu_custom_call.1} parent=1 // loop_exit
      _
    %903 = vsyncpa [#allocation5], 1
    %s904 = scalar_lea.sflag [#allocation5], 1
    %905 = vsyncpa %s904, 1
    %906 = vsyncpa [#allocation6], 1
    %s907 = scalar_lea.sflag [#allocation6], 1
    %908 = vsyncpa %s907, 1

</llo_original>
